<compile_context>
chip_gen: v7x
topology: tpu7x:2x2x1
jax: 0.10.0
libtpu: 0.0.40
codegen_flags: <defaults>
</compile_context>

<pallas_src>
import jax
import jax.numpy as jnp
import numpy as np
from jax import lax
from jax.experimental import pallas as pl
from jax.experimental.pallas import tpu as pltpu

B = 2      # batch
T = 8      # sequence length
H = 32     # hidden size
I = 1      # input size
PACK_ROWS = 8 + H   # 8 sublane-aligned "small param" rows + H rows of W_hh^T


def rnn_kernel(x_ref, h0_ref, wp_ref, blin_ref, y_ref, hout_ref):
    # x_ref:    (T, B)        time-major input (input_size == 1 squeezed)
    # h0_ref:   (B, H)        initial hidden state
    # wp_ref:   (8 + H, H)    packed parameters:
    #             row 0      : w_ih   (input->hidden weights, input_size == 1)
    #             row 1      : b_ih + b_hh
    #             row 2      : w_lin  (Linear(32, 1) weight row)
    #             rows 3..7  : zero padding (sublane alignment)
    #             rows 8..   : W_hh^T (H x H)
    # blin_ref: (1,) in SMEM  Linear bias scalar
    x = x_ref[...]                    # (T, B)
    wih = wp_ref[0:1, :]              # (1, H)
    b = wp_ref[1:2, :]                # (1, H)
    wout = wp_ref[2:3, :]             # (1, H)
    whh = wp_ref[8:8 + H, :]          # (H, H)  == W_hh^T

    # Hoisted input projection for ALL time steps, time-major (pure VPU,
    # off the serial recurrence chain):
    #   xb[t, b, h] = x[t, b] * w_ih[h] + (b_ih + b_hh)[h]
    xb = x[:, :, None] * wih[None, :, :] + b[None, :, :]     # (T, B, H)

    # Fully unrolled serial recurrence: h_t = tanh(xb_t + h_{t-1} @ W_hh^T).
    # xb[t] is a whole-tile (B, H) slice -> no cross-sublane shuffles.
    h = h0_ref[...]                   # (B, H)
    hs = []
    for t in range(T):                # T = 8, static unroll
        pre = xb[t] + jnp.dot(h, whh, preferred_element_type=jnp.float32)
        h = jnp.tanh(pre)
        hs.append(h)

    # Hoisted output head for all steps at once, stored as one (T, B) slab:
    #   y[t, b] = sum_h h_t[b, h] * w_lin[h] + b_lin
    h_all = jnp.stack(hs, axis=0)                              # (T, B, H)
    y = jnp.sum(h_all * wout[None, :, :], axis=-1) + blin_ref[0]   # (T, B)

    y_ref[...] = y
    hout_ref[...] = h


def pack_params(params):
    """One-time parameter preprocessing (hoisted out of the per-call path)."""
    w_ih, w_hh, b_ih, b_hh, w_lin, b_lin = params
    rows = jnp.zeros((PACK_ROWS, H), jnp.float32)
    rows = rows.at[0, :].set(w_ih.reshape(H))            # w_ih (input_size==1)
    rows = rows.at[1, :].set((b_ih + b_hh).reshape(H))   # combined RNN bias
    rows = rows.at[2, :].set(w_lin.reshape(H))           # Linear weight row
    rows = rows.at[8:, :].set(w_hh.T)                    # W_hh^T
    blin = b_lin.reshape(1).astype(jnp.float32)          # Linear bias scalar
    return rows, blin


@jax.jit
def rnn_forward(x, h_state, wpack, blin):
    """x: (B, T, 1) f32, h_state: (1, B, H) f32, wpack/blin from pack_params.
    Returns (y (B, T, 1), h_state (1, B, H))."""
    Bx, Tx, Ix = x.shape
    assert (Bx, Tx, Ix) == (B, T, I)

    x_tm = jnp.transpose(x, (1, 0, 2)).reshape(T, B)   # time-major, squeeze I=1
    h0 = h_state[0]                                    # (B, H)

    y_tm, h_final = pl.pallas_call(
        rnn_kernel,
        out_shape=(
            jax.ShapeDtypeStruct((T, B), jnp.float32),
            jax.ShapeDtypeStruct((B, H), jnp.float32),
        ),
        in_specs=[
            pl.BlockSpec(memory_space=pltpu.MemorySpace.VMEM),   # x (T, B)
            pl.BlockSpec(memory_space=pltpu.MemorySpace.VMEM),   # h0 (B, H)
            pl.BlockSpec(memory_space=pltpu.MemorySpace.VMEM),   # packed params
            pl.BlockSpec(memory_space=pltpu.MemorySpace.SMEM),   # b_lin scalar
        ],
        out_specs=(
            pl.BlockSpec(memory_space=pltpu.MemorySpace.VMEM),   # y (T, B)
            pl.BlockSpec(memory_space=pltpu.MemorySpace.VMEM),   # h_final (B, H)
        ),
        input_output_aliases={1: 1},   # h0 buffer aliases h_final buffer
    )(x_tm, h0, wpack, blin)

    y = jnp.transpose(y_tm)[:, :, None]   # (B, T, 1)
    return y, h_final[None]               # (B, T, 1), (1, B, H)


def reference_forward(x, h_state, params):
    """Pure-JAX reference matching torch.nn.RNN + per-step Linear."""
    w_ih, w_hh, b_ih, b_hh, w_lin, b_lin = params

    def step(h, x_t):
        h_new = jnp.tanh(x_t @ w_ih.T + b_ih + h @ w_hh.T + b_hh)
        y_t = h_new @ w_lin.T + b_lin
        return h_new, y_t

    h_final, ys = lax.scan(step, h_state[0], jnp.transpose(x, (1, 0, 2)))
    return jnp.transpose(ys, (1, 0, 2)), h_final[None]


def init_params(key):
    # PyTorch default init: U(-1/sqrt(H), 1/sqrt(H)) for RNN and Linear params.
    k = 1.0 / np.sqrt(H)
    ks = jax.random.split(key, 6)
    w_ih = jax.random.uniform(ks[0], (H, I), jnp.float32, -k, k)
    w_hh = jax.random.uniform(ks[1], (H, H), jnp.float32, -k, k)
    b_ih = jax.random.uniform(ks[2], (H,), jnp.float32, -k, k)
    b_hh = jax.random.uniform(ks[3], (H,), jnp.float32, -k, k)
    w_lin = jax.random.uniform(ks[4], (1, H), jnp.float32, -k, k)
    b_lin = jax.random.uniform(ks[5], (1,), jnp.float32, -k, k)
    return (w_ih, w_hh, b_ih, b_hh, w_lin, b_lin)


if __name__ == "__main__":
    key = jax.random.PRNGKey(0)
    kx, kh, kp = jax.random.split(key, 3)
    x = jax.random.normal(kx, (B, T, I), jnp.float32)
    h_state = jax.random.normal(kh, (1, B, H), jnp.float32)
    params = init_params(kp)

    # One-time parameter packing (amortized across calls in a decode loop).
    wpack, blin = jax.block_until_ready(pack_params(params))

    y, h_out = jax.block_until_ready(rnn_forward(x, h_state, wpack, blin))
    y_ref, h_ref = reference_forward(x, h_state, params)

    np.testing.assert_allclose(np.asarray(y), np.asarray(y_ref), rtol=1e-5, atol=1e-5)
    np.testing.assert_allclose(np.asarray(h_out), np.asarray(h_ref), rtol=1e-5, atol=1e-5)
    print("KERNEL_OK")
</pallas_src>

<mosaic_0001>
module attributes {stable_mosaic.version = 11 : i64} {
  func.func @rnn_kernel(%arg0: memref<8x2xf32, #tpu.memory_space<vmem>>, %arg1: memref<2x32xf32, #tpu.memory_space<vmem>>, %arg2: memref<40x32xf32, #tpu.memory_space<vmem>>, %arg3: memref<1xf32, #tpu.memory_space<smem>>, %arg4: memref<8x2xf32, #tpu.memory_space<vmem>>, %arg5: memref<2x32xf32, #tpu.memory_space<vmem>>) attributes {dimension_semantics = [], scalar_prefetch = 0 : i64, scratch_operands = 0 : i64, tpu.core_type = #tpu.core_type<tc>} {
    %c0 = arith.constant 0 : index
    %c0_0 = arith.constant 0 : index
    %0 = vector.load %arg0[%c0, %c0_0] : memref<8x2xf32, #tpu.memory_space<vmem>>, vector<8x2xf32>
    %c0_1 = arith.constant 0 : index
    %c0_2 = arith.constant 0 : index
    %1 = vector.load %arg2[%c0_1, %c0_2] : memref<40x32xf32, #tpu.memory_space<vmem>>, vector<1x32xf32>
    %c1 = arith.constant 1 : index
    %c0_3 = arith.constant 0 : index
    %2 = vector.load %arg2[%c1, %c0_3] : memref<40x32xf32, #tpu.memory_space<vmem>>, vector<1x32xf32>
    %c2 = arith.constant 2 : index
    %c0_4 = arith.constant 0 : index
    %3 = vector.load %arg2[%c2, %c0_4] : memref<40x32xf32, #tpu.memory_space<vmem>>, vector<1x32xf32>
    %c8 = arith.constant 8 : index
    %c0_5 = arith.constant 0 : index
    %4 = vector.load %arg2[%c8, %c0_5] : memref<40x32xf32, #tpu.memory_space<vmem>>, vector<32x32xf32>
    %5 = vector.shape_cast %0 : vector<8x2xf32> to vector<8x2x1xf32>
    %6 = vector.shape_cast %1 : vector<1x32xf32> to vector<1x1x32xf32>
    %7 = vector.broadcast %5 : vector<8x2x1xf32> to vector<8x2x32xf32>
    %8 = vector.broadcast %6 : vector<1x1x32xf32> to vector<8x2x32xf32>
    %9 = arith.mulf %7, %8 : vector<8x2x32xf32>
    %10 = vector.shape_cast %2 : vector<1x32xf32> to vector<1x1x32xf32>
    %11 = vector.broadcast %10 : vector<1x1x32xf32> to vector<8x2x32xf32>
    %12 = arith.addf %9, %11 : vector<8x2x32xf32>
    %c0_6 = arith.constant 0 : index
    %c0_7 = arith.constant 0 : index
    %13 = vector.load %arg1[%c0_6, %c0_7] : memref<2x32xf32, #tpu.memory_space<vmem>>, vector<2x32xf32>
    %14 = vector.extract_strided_slice %12 {offsets = [0, 0, 0], sizes = [1, 2, 32], strides = [1, 1, 1]} : vector<8x2x32xf32> to vector<1x2x32xf32>
    %15 = vector.shape_cast %14 : vector<1x2x32xf32> to vector<2x32xf32>
    %cst = arith.constant dense<0.000000e+00> : vector<2x32xf32>
    %16 = tpu.matmul %13, %4, %cst {dimension_numbers = #tpu.dot_dimension_numbers<[1], [0], [0], [1], [0, 0, 1, 1], [], []>} : vector<2x32xf32>, vector<32x32xf32>, vector<2x32xf32> -> vector<2x32xf32>
    %17 = arith.addf %15, %16 : vector<2x32xf32>
    %18 = math.tanh %17 : vector<2x32xf32>
    %19 = vector.extract_strided_slice %12 {offsets = [1, 0, 0], sizes = [1, 2, 32], strides = [1, 1, 1]} : vector<8x2x32xf32> to vector<1x2x32xf32>
    %20 = vector.shape_cast %19 : vector<1x2x32xf32> to vector<2x32xf32>
    %cst_8 = arith.constant dense<0.000000e+00> : vector<2x32xf32>
    %21 = tpu.matmul %18, %4, %cst_8 {dimension_numbers = #tpu.dot_dimension_numbers<[1], [0], [0], [1], [0, 0, 1, 1], [], []>} : vector<2x32xf32>, vector<32x32xf32>, vector<2x32xf32> -> vector<2x32xf32>
    %22 = arith.addf %20, %21 : vector<2x32xf32>
    %23 = math.tanh %22 : vector<2x32xf32>
    %24 = vector.extract_strided_slice %12 {offsets = [2, 0, 0], sizes = [1, 2, 32], strides = [1, 1, 1]} : vector<8x2x32xf32> to vector<1x2x32xf32>
    %25 = vector.shape_cast %24 : vector<1x2x32xf32> to vector<2x32xf32>
    %cst_9 = arith.constant dense<0.000000e+00> : vector<2x32xf32>
    %26 = tpu.matmul %23, %4, %cst_9 {dimension_numbers = #tpu.dot_dimension_numbers<[1], [0], [0], [1], [0, 0, 1, 1], [], []>} : vector<2x32xf32>, vector<32x32xf32>, vector<2x32xf32> -> vector<2x32xf32>
    %27 = arith.addf %25, %26 : vector<2x32xf32>
    %28 = math.tanh %27 : vector<2x32xf32>
    %29 = vector.extract_strided_slice %12 {offsets = [3, 0, 0], sizes = [1, 2, 32], strides = [1, 1, 1]} : vector<8x2x32xf32> to vector<1x2x32xf32>
    %30 = vector.shape_cast %29 : vector<1x2x32xf32> to vector<2x32xf32>
    %cst_10 = arith.constant dense<0.000000e+00> : vector<2x32xf32>
    %31 = tpu.matmul %28, %4, %cst_10 {dimension_numbers = #tpu.dot_dimension_numbers<[1], [0], [0], [1], [0, 0, 1, 1], [], []>} : vector<2x32xf32>, vector<32x32xf32>, vector<2x32xf32> -> vector<2x32xf32>
    %32 = arith.addf %30, %31 : vector<2x32xf32>
    %33 = math.tanh %32 : vector<2x32xf32>
    %34 = vector.extract_strided_slice %12 {offsets = [4, 0, 0], sizes = [1, 2, 32], strides = [1, 1, 1]} : vector<8x2x32xf32> to vector<1x2x32xf32>
    %35 = vector.shape_cast %34 : vector<1x2x32xf32> to vector<2x32xf32>
    %cst_11 = arith.constant dense<0.000000e+00> : vector<2x32xf32>
    %36 = tpu.matmul %33, %4, %cst_11 {dimension_numbers = #tpu.dot_dimension_numbers<[1], [0], [0], [1], [0, 0, 1, 1], [], []>} : vector<2x32xf32>, vector<32x32xf32>, vector<2x32xf32> -> vector<2x32xf32>
    %37 = arith.addf %35, %36 : vector<2x32xf32>
    %38 = math.tanh %37 : vector<2x32xf32>
    %39 = vector.extract_strided_slice %12 {offsets = [5, 0, 0], sizes = [1, 2, 32], strides = [1, 1, 1]} : vector<8x2x32xf32> to vector<1x2x32xf32>
    %40 = vector.shape_cast %39 : vector<1x2x32xf32> to vector<2x32xf32>
    %cst_12 = arith.constant dense<0.000000e+00> : vector<2x32xf32>
    %41 = tpu.matmul %38, %4, %cst_12 {dimension_numbers = #tpu.dot_dimension_numbers<[1], [0], [0], [1], [0, 0, 1, 1], [], []>} : vector<2x32xf32>, vector<32x32xf32>, vector<2x32xf32> -> vector<2x32xf32>
    %42 = arith.addf %40, %41 : vector<2x32xf32>
    %43 = math.tanh %42 : vector<2x32xf32>
    %44 = vector.extract_strided_slice %12 {offsets = [6, 0, 0], sizes = [1, 2, 32], strides = [1, 1, 1]} : vector<8x2x32xf32> to vector<1x2x32xf32>
    %45 = vector.shape_cast %44 : vector<1x2x32xf32> to vector<2x32xf32>
    %cst_13 = arith.constant dense<0.000000e+00> : vector<2x32xf32>
    %46 = tpu.matmul %43, %4, %cst_13 {dimension_numbers = #tpu.dot_dimension_numbers<[1], [0], [0], [1], [0, 0, 1, 1], [], []>} : vector<2x32xf32>, vector<32x32xf32>, vector<2x32xf32> -> vector<2x32xf32>
    %47 = arith.addf %45, %46 : vector<2x32xf32>
    %48 = math.tanh %47 : vector<2x32xf32>
    %49 = vector.extract_strided_slice %12 {offsets = [7, 0, 0], sizes = [1, 2, 32], strides = [1, 1, 1]} : vector<8x2x32xf32> to vector<1x2x32xf32>
    %50 = vector.shape_cast %49 : vector<1x2x32xf32> to vector<2x32xf32>
    %cst_14 = arith.constant dense<0.000000e+00> : vector<2x32xf32>
    %51 = tpu.matmul %48, %4, %cst_14 {dimension_numbers = #tpu.dot_dimension_numbers<[1], [0], [0], [1], [0, 0, 1, 1], [], []>} : vector<2x32xf32>, vector<32x32xf32>, vector<2x32xf32> -> vector<2x32xf32>
    %52 = arith.addf %50, %51 : vector<2x32xf32>
    %53 = math.tanh %52 : vector<2x32xf32>
    %54 = vector.shape_cast %18 : vector<2x32xf32> to vector<1x2x32xf32>
    %55 = vector.shape_cast %23 : vector<2x32xf32> to vector<1x2x32xf32>
    %56 = vector.shape_cast %28 : vector<2x32xf32> to vector<1x2x32xf32>
    %57 = vector.shape_cast %33 : vector<2x32xf32> to vector<1x2x32xf32>
    %58 = vector.shape_cast %38 : vector<2x32xf32> to vector<1x2x32xf32>
    %59 = vector.shape_cast %43 : vector<2x32xf32> to vector<1x2x32xf32>
    %60 = vector.shape_cast %48 : vector<2x32xf32> to vector<1x2x32xf32>
    %61 = vector.shape_cast %53 : vector<2x32xf32> to vector<1x2x32xf32>
    %62 = tpu.concatenate %54, %55, %56, %57, %58, %59, %60, %61 in 0 : vector<1x2x32xf32>, vector<1x2x32xf32>, vector<1x2x32xf32>, vector<1x2x32xf32>, vector<1x2x32xf32>, vector<1x2x32xf32>, vector<1x2x32xf32>, vector<1x2x32xf32> -> vector<8x2x32xf32>
    %63 = vector.shape_cast %3 : vector<1x32xf32> to vector<1x1x32xf32>
    %64 = vector.broadcast %63 : vector<1x1x32xf32> to vector<8x2x32xf32>
    %65 = arith.mulf %62, %64 : vector<8x2x32xf32>
    %cst_15 = arith.constant dense<0.000000e+00> : vector<8x2xf32>
    %66 = vector.multi_reduction <add>, %65, %cst_15 [2] : vector<8x2x32xf32> to vector<8x2xf32>
    %c0_16 = arith.constant 0 : index
    %67 = memref.load %arg3[%c0_16] : memref<1xf32, #tpu.memory_space<smem>>
    %68 = vector.broadcast %67 : f32 to vector<8x2xf32>
    %69 = arith.addf %66, %68 : vector<8x2xf32>
    %c0_17 = arith.constant 0 : index
    %c0_18 = arith.constant 0 : index
    %70 = vector.load %arg4[%c0_17, %c0_18] : memref<8x2xf32, #tpu.memory_space<vmem>>, vector<8x2xf32>
    tpu.vector_store %arg4[%c0_17, %c0_18], %69 {strides = array<i32>} : memref<8x2xf32, #tpu.memory_space<vmem>>, vector<8x2xf32>,
    %c0_19 = arith.constant 0 : index
    %c0_20 = arith.constant 0 : index
    %71 = vector.load %arg5[%c0_19, %c0_20] : memref<2x32xf32, #tpu.memory_space<vmem>>, vector<2x32xf32>
    tpu.vector_store %arg5[%c0_19, %c0_20], %53 {strides = array<i32>} : memref<2x32xf32, #tpu.memory_space<vmem>>, vector<2x32xf32>,
    return
  }
}

</mosaic_0001>

<llo_original>
// kernel: rnn_forward.1
$region0: #{rnn_forward.1}
  #allocation0 [shape = 'u32[]', space=smem, size = 0x4, offset = 0x4, fixed_abs, tag = 'smem constant byte address 0x4 - core index']
  #allocation1 [shape = 'u32[144,128]{1,0:T(1,128)}', space=vmem, size = 0x12000, scoped, tag = 'internal scratch']
  #allocation2 [shape = 'f32[1]{0:T(128)S(6)}', space=smem, size = 0x200, scoped, tag = 'scoped memory for rnn_forward.1']
  %s0 = inlined_call_operand.vmem [shape: f32[8,2], index: 0, kind: input, shape index: {}]
  %s1 = inlined_call_operand.vmem [shape: f32[2,32], index: 1, kind: input, shape index: {}, may-alias: {1,5}]
  %s2 = inlined_call_operand.vmem [shape: f32[40,32], index: 2, kind: input, shape index: {}]
  %s3 = inlined_call_operand.<no memory space> [shape: f32[1], index: 3, kind: input, shape index: {}]
  %s4 = inlined_call_operand.vmem [shape: f32[8,2], index: 4, kind: output, shape index: {0}]
  %s5 = inlined_call_operand.vmem [shape: f32[2,32], index: 5, kind: output, shape index: {1}, may-alias: {1,5}]
  %6 = xla_tuple %s4, %s5
  %s7 = sld [smem:[#allocation0]]
  $region34: #{rnn_forward.1} parent=0
    _
  %s9 = ssub.s32 1, %s7
  %s10 = scalar_select 0, %s9, %s7
  %11 = sst [smem:[#allocation2]] %s3
  // Predicated region
  $region2: #{rnn_forward.1} parent=0 // pred_check
    _
  $region3: #{rnn_forward.1} parent=0 // pred_check_branch
    %13 = sbr.rel (0) target = $region5
  $region4: #{rnn_forward.1} parent=0 // pred_region
    _
  $region5: #{rnn_forward.1} parent=0 // pred_fallthru
    _
  // Predicated region
  $region6: #{rnn_forward.1} parent=0 // pred_check
    _
  $region7: #{rnn_forward.1} parent=0 // pred_check_branch
    %15 = sbr.rel (0) target = $region9
  $region8: #{rnn_forward.1} parent=0 // pred_region
    _
  $region9: #{rnn_forward.1} parent=0 // pred_fallthru
    _
  // Predicated region
  $region10: #{rnn_forward.1} parent=0 // pred_check
    _
  $region11: #{rnn_forward.1} parent=0 // pred_check_branch
    %17 = sbr.rel (0) target = $region13
  $region12: #{rnn_forward.1} parent=0 // pred_region
    _
  $region13: #{rnn_forward.1} parent=0 // pred_fallthru
    _
  // Predicated region
  $region14: #{rnn_forward.1} parent=0 // pred_check
    _
  $region15: #{rnn_forward.1} parent=0 // pred_check_branch
    %19 = sbr.rel (0) target = $region17
  $region16: #{rnn_forward.1} parent=0 // pred_region
    _
  $region17: #{rnn_forward.1} parent=0 // pred_fallthru
    _
  %v20 = vld [vmem:[%s0] sm:$0xff]
  %v21 = vld [vmem:[%s2] sm:$0x1]
  %v22 = vld [vmem:[%s2 + $0x1] sm:$0x1]
  %v23 = vld [vmem:[%s2 + $0x2] sm:$0x1]
  %v24 = vld [vmem:[%s2 + $0x8] sm:$0xff]
  %v25 = vld [vmem:[%s2 + $0x10] sm:$0xff]
  %v26 = vld [vmem:[%s2 + $0x18] sm:$0xff]
  %v27 = vld [vmem:[%s2 + $0x20] sm:$0xff]
  %v28 = vlaneseq
  %v29 = vshrl.u32 %v28, 7
  %v30 = vsub.s32 0, %v29
  %v31 = vrot.slane %v20, %v30
  %33 = vbcast.lane.b32.xlu0 %v31, 256
  %v34 = vpop.permute.xlu0 %33
  %v35 = vlaneseq
  %v36 = vshrl.u32 %v35, 7
  %v37 = vsub.s32 1, %v36
  %v38 = vrot.slane %v20, %v37
  %40 = vbcast.lane.b32.xlu0 %v38, 256
  %v41 = vpop.permute.xlu0 %40
  %v42 = vlaneseq
  %v43 = vshrl.u32 %v42, 7
  %v44 = vsub.s32 2, %v43
  %v45 = vrot.slane %v20, %v44
  %47 = vbcast.lane.b32.xlu0 %v45, 256
  %v48 = vpop.permute.xlu0 %47
  %v49 = vlaneseq
  %v50 = vshrl.u32 %v49, 7
  %v51 = vsub.s32 3, %v50
  %v52 = vrot.slane %v20, %v51
  %54 = vbcast.lane.b32.xlu0 %v52, 256
  %v55 = vpop.permute.xlu0 %54
  %v56 = vlaneseq
  %v57 = vshrl.u32 %v56, 7
  %v58 = vsub.s32 4, %v57
  %v59 = vrot.slane %v20, %v58
  %61 = vbcast.lane.b32.xlu0 %v59, 256
  %v62 = vpop.permute.xlu0 %61
  %v63 = vlaneseq
  %v64 = vshrl.u32 %v63, 7
  %v65 = vsub.s32 5, %v64
  %v66 = vrot.slane %v20, %v65
  %68 = vbcast.lane.b32.xlu0 %v66, 256
  %v69 = vpop.permute.xlu0 %68
  %v70 = vlaneseq
  %v71 = vshrl.u32 %v70, 7
  %v72 = vsub.s32 6, %v71
  %v73 = vrot.slane %v20, %v72
  %75 = vbcast.lane.b32.xlu0 %v73, 256
  %v76 = vpop.permute.xlu0 %75
  %v77 = vlaneseq
  %v78 = vshrl.u32 %v77, 7
  %v79 = vsub.s32 7, %v78
  %v80 = vrot.slane %v20, %v79
  %82 = vbcast.lane.b32.xlu0 %v80, 256
  %v83 = vpop.permute.xlu0 %82
  %v84 = vlaneseq
  %v85 = vshrl.u32 %v84, 7
  %v86 = vsub.s32 0, %v85
  %v87 = vrot.slane %v21, %v86
  %v88 = vmul.f32 %v34, %v87
  %v89 = vmul.f32 %v41, %v87
  %v90 = vmul.f32 %v48, %v87
  %v91 = vmul.f32 %v55, %v87
  %v92 = vmul.f32 %v62, %v87
  %v93 = vmul.f32 %v69, %v87
  %v94 = vmul.f32 %v76, %v87
  %v95 = vmul.f32 %v83, %v87
  %v96 = vlaneseq
  %v97 = vshrl.u32 %v96, 7
  %v98 = vsub.s32 0, %v97
  %v99 = vrot.slane %v22, %v98
  %v100 = vadd.f32 %v88, %v99
  %v101 = vadd.f32 %v89, %v99
  %v102 = vadd.f32 %v90, %v99
  %v103 = vadd.f32 %v91, %v99
  %v104 = vadd.f32 %v92, %v99
  %v105 = vadd.f32 %v93, %v99
  %v106 = vadd.f32 %v94, %v99
  %v107 = vadd.f32 %v95, %v99
  %v108 = vld [vmem:[%s1] sm:$0x3]
  %vm109 = vcmask 261120
  %v111 = vsel %vm109, %v108, 0
  %113 = vmatprep.subr.mxu0 0.0
  %114 = vmatpush1.msra.mxu0 %v24
  %115 = vmatprep.subr.mxu0 0.0
  %116 = vmatpush1.msra.mxu0 %v25
  %117 = vmatprep.subr.mxu0 0.0
  %118 = vmatpush1.msra.mxu0 %v26
  %119 = vmatprep.subr.mxu0 0.0
  %120 = vmatpush1.msra.mxu0 %v27
  %121 = vmatprep.subr.mxu0 0.0
  %122 = vmatpush1.msra.mxu0 0.0
  %123 = vmatprep.subr.mxu0 0.0
  %124 = vmatpush1.msra.mxu0 0.0
  %125 = vmatprep.subr.mxu0 0.0
  %126 = vmatpush1.msra.mxu0 0.0
  %127 = vmatprep.subr.mxu0 0.0
  %128 = vmatpush1.msra.mxu0 0.0
  %129 = vmatprep.subr.mxu0 0.0
  %130 = vmatpush1.msra.mxu0 0.0
  %131 = vmatprep.subr.mxu0 0.0
  %132 = vmatpush1.msra.mxu0 0.0
  %133 = vmatprep.subr.mxu0 0.0
  %134 = vmatpush1.msra.mxu0 0.0
  %135 = vmatprep.subr.mxu0 0.0
  %136 = vmatpush1.msra.mxu0 0.0
  %137 = vmatprep.subr.mxu0 0.0
  %138 = vmatpush1.msra.mxu0 0.0
  %139 = vmatprep.subr.mxu0 0.0
  %140 = vmatpush1.msra.mxu0 0.0
  %141 = vmatprep.subr.mxu0 0.0
  %142 = vmatpush1.msra.mxu0 0.0
  %143 = vmatprep.subr.mxu0 0.0
  %144 = vmatpush1.msra.mxu0 0.0
  %145 = vmatprep.subr.mxu0 0.0
  %146 = vmatpush1.msra.mxu0 0.0
  %147 = vmatprep.subr.mxu0 0.0
  %148 = vmatpush1.msra.mxu0 0.0
  %149 = vmatprep.subr.mxu0 0.0
  %150 = vmatpush1.msra.mxu0 0.0
  %151 = vmatprep.subr.mxu0 0.0
  %152 = vmatpush1.msra.mxu0 0.0
  %153 = vmatprep.subr.mxu0 0.0
  %154 = vmatpush1.msra.mxu0 0.0
  %155 = vmatprep.subr.mxu0 0.0
  %156 = vmatpush1.msra.mxu0 0.0
  %157 = vmatprep.subr.mxu0 0.0
  %158 = vmatpush1.msra.mxu0 0.0
  %159 = vmatprep.subr.mxu0 0.0
  %160 = vmatpush1.msra.mxu0 0.0
  %161 = vmatprep.subr.mxu0 0.0
  %162 = vmatpush1.msra.mxu0 0.0
  %163 = vmatprep.subr.mxu0 0.0
  %164 = vmatpush1.msra.mxu0 0.0
  %165 = vmatprep.subr.mxu0 0.0
  %166 = vmatpush1.msra.mxu0 0.0
  %167 = vmatprep.subr.mxu0 0.0
  %168 = vmatpush1.msra.mxu0 0.0
  %169 = vmatprep.subr.mxu0 0.0
  %170 = vmatpush1.msra.mxu0 0.0
  %171 = vmatprep.subr.mxu0 0.0
  %172 = vmatpush1.msra.mxu0 0.0
  %173 = vmatprep.subr.mxu0 0.0
  %174 = vmatpush1.msra.mxu0 0.0
  %175 = vmatprep.subr.mxu0 0.0
  %176 = vmatpush1.msra.mxu0 0.0
  %177 = vmatprep.mubr.f32.mxu0 0.0
  %178 = vmatmul.mubr.f32.gmra.mrb[0].mxu0 %v111
  %v179 = vpop.f32.mrb[0].mxu0
  %v180 = vadd.f32 0.0, %v179
  %v181 = vpop.f32.mrb[0].mxu0
  %182 = vdwg.mxu0
  %v183 = vadd.f32 %v100, %v180
  %v184 = vtanh.pop %v183
  %v186 = vsel %vm109, %v184, 0
  %188 = vmatprep.subr.mxu0 0.0
  %189 = vmatpush1.msra.mxu0 %v24
  %190 = vmatprep.subr.mxu0 0.0
  %191 = vmatpush1.msra.mxu0 %v25
  %192 = vmatprep.subr.mxu0 0.0
  %193 = vmatpush1.msra.mxu0 %v26
  %194 = vmatprep.subr.mxu0 0.0
  %195 = vmatpush1.msra.mxu0 %v27
  %196 = vmatprep.subr.mxu0 0.0
  %197 = vmatpush1.msra.mxu0 0.0
  %198 = vmatprep.subr.mxu0 0.0
  %199 = vmatpush1.msra.mxu0 0.0
  %200 = vmatprep.subr.mxu0 0.0
  %201 = vmatpush1.msra.mxu0 0.0
  %202 = vmatprep.subr.mxu0 0.0
  %203 = vmatpush1.msra.mxu0 0.0
  %204 = vmatprep.subr.mxu0 0.0
  %205 = vmatpush1.msra.mxu0 0.0
  %206 = vmatprep.subr.mxu0 0.0
  %207 = vmatpush1.msra.mxu0 0.0
  %208 = vmatprep.subr.mxu0 0.0
  %209 = vmatpush1.msra.mxu0 0.0
  %210 = vmatprep.subr.mxu0 0.0
  %211 = vmatpush1.msra.mxu0 0.0
  %212 = vmatprep.subr.mxu0 0.0
  %213 = vmatpush1.msra.mxu0 0.0
  %214 = vmatprep.subr.mxu0 0.0
  %215 = vmatpush1.msra.mxu0 0.0
  %216 = vmatprep.subr.mxu0 0.0
  %217 = vmatpush1.msra.mxu0 0.0
  %218 = vmatprep.subr.mxu0 0.0
  %219 = vmatpush1.msra.mxu0 0.0
  %220 = vmatprep.subr.mxu0 0.0
  %221 = vmatpush1.msra.mxu0 0.0
  %222 = vmatprep.subr.mxu0 0.0
  %223 = vmatpush1.msra.mxu0 0.0
  %224 = vmatprep.subr.mxu0 0.0
  %225 = vmatpush1.msra.mxu0 0.0
  %226 = vmatprep.subr.mxu0 0.0
  %227 = vmatpush1.msra.mxu0 0.0
  %228 = vmatprep.subr.mxu0 0.0
  %229 = vmatpush1.msra.mxu0 0.0
  %230 = vmatprep.subr.mxu0 0.0
  %231 = vmatpush1.msra.mxu0 0.0
  %232 = vmatprep.subr.mxu0 0.0
  %233 = vmatpush1.msra.mxu0 0.0
  %234 = vmatprep.subr.mxu0 0.0
  %235 = vmatpush1.msra.mxu0 0.0
  %236 = vmatprep.subr.mxu0 0.0
  %237 = vmatpush1.msra.mxu0 0.0
  %238 = vmatprep.subr.mxu0 0.0
  %239 = vmatpush1.msra.mxu0 0.0
  %240 = vmatprep.subr.mxu0 0.0
  %241 = vmatpush1.msra.mxu0 0.0
  %242 = vmatprep.subr.mxu0 0.0
  %243 = vmatpush1.msra.mxu0 0.0
  %244 = vmatprep.subr.mxu0 0.0
  %245 = vmatpush1.msra.mxu0 0.0
  %246 = vmatprep.subr.mxu0 0.0
  %247 = vmatpush1.msra.mxu0 0.0
  %248 = vmatprep.subr.mxu0 0.0
  %249 = vmatpush1.msra.mxu0 0.0
  %250 = vmatprep.subr.mxu0 0.0
  %251 = vmatpush1.msra.mxu0 0.0
  %252 = vmatprep.mubr.f32.mxu0 0.0
  %253 = vmatmul.mubr.f32.gmra.mrb[0].mxu0 %v186
  %v254 = vpop.f32.mrb[0].mxu0
  %v255 = vadd.f32 0.0, %v254
  %v256 = vpop.f32.mrb[0].mxu0
  %257 = vdwg.mxu0
  %v258 = vadd.f32 %v101, %v255
  %v259 = vtanh.pop %v258
  %v261 = vsel %vm109, %v259, 0
  %263 = vmatprep.subr.mxu0 0.0
  %264 = vmatpush1.msra.mxu0 %v24
  %265 = vmatprep.subr.mxu0 0.0
  %266 = vmatpush1.msra.mxu0 %v25
  %267 = vmatprep.subr.mxu0 0.0
  %268 = vmatpush1.msra.mxu0 %v26
  %269 = vmatprep.subr.mxu0 0.0
  %270 = vmatpush1.msra.mxu0 %v27
  %271 = vmatprep.subr.mxu0 0.0
  %272 = vmatpush1.msra.mxu0 0.0
  %273 = vmatprep.subr.mxu0 0.0
  %274 = vmatpush1.msra.mxu0 0.0
  %275 = vmatprep.subr.mxu0 0.0
  %276 = vmatpush1.msra.mxu0 0.0
  %277 = vmatprep.subr.mxu0 0.0
  %278 = vmatpush1.msra.mxu0 0.0
  %279 = vmatprep.subr.mxu0 0.0
  %280 = vmatpush1.msra.mxu0 0.0
  %281 = vmatprep.subr.mxu0 0.0
  %282 = vmatpush1.msra.mxu0 0.0
  %283 = vmatprep.subr.mxu0 0.0
  %284 = vmatpush1.msra.mxu0 0.0
  %285 = vmatprep.subr.mxu0 0.0
  %286 = vmatpush1.msra.mxu0 0.0
  %287 = vmatprep.subr.mxu0 0.0
  %288 = vmatpush1.msra.mxu0 0.0
  %289 = vmatprep.subr.mxu0 0.0
  %290 = vmatpush1.msra.mxu0 0.0
  %291 = vmatprep.subr.mxu0 0.0
  %292 = vmatpush1.msra.mxu0 0.0
  %293 = vmatprep.subr.mxu0 0.0
  %294 = vmatpush1.msra.mxu0 0.0
  %295 = vmatprep.subr.mxu0 0.0
  %296 = vmatpush1.msra.mxu0 0.0
  %297 = vmatprep.subr.mxu0 0.0
  %298 = vmatpush1.msra.mxu0 0.0
  %299 = vmatprep.subr.mxu0 0.0
  %300 = vmatpush1.msra.mxu0 0.0
  %301 = vmatprep.subr.mxu0 0.0
  %302 = vmatpush1.msra.mxu0 0.0
  %303 = vmatprep.subr.mxu0 0.0
  %304 = vmatpush1.msra.mxu0 0.0
  %305 = vmatprep.subr.mxu0 0.0
  %306 = vmatpush1.msra.mxu0 0.0
  %307 = vmatprep.subr.mxu0 0.0
  %308 = vmatpush1.msra.mxu0 0.0
  %309 = vmatprep.subr.mxu0 0.0
  %310 = vmatpush1.msra.mxu0 0.0
  %311 = vmatprep.subr.mxu0 0.0
  %312 = vmatpush1.msra.mxu0 0.0
  %313 = vmatprep.subr.mxu0 0.0
  %314 = vmatpush1.msra.mxu0 0.0
  %315 = vmatprep.subr.mxu0 0.0
  %316 = vmatpush1.msra.mxu0 0.0
  %317 = vmatprep.subr.mxu0 0.0
  %318 = vmatpush1.msra.mxu0 0.0
  %319 = vmatprep.subr.mxu0 0.0
  %320 = vmatpush1.msra.mxu0 0.0
  %321 = vmatprep.subr.mxu0 0.0
  %322 = vmatpush1.msra.mxu0 0.0
  %323 = vmatprep.subr.mxu0 0.0
  %324 = vmatpush1.msra.mxu0 0.0
  %325 = vmatprep.subr.mxu0 0.0
  %326 = vmatpush1.msra.mxu0 0.0
  %327 = vmatprep.mubr.f32.mxu0 0.0
  %328 = vmatmul.mubr.f32.gmra.mrb[0].mxu0 %v261
  %v329 = vpop.f32.mrb[0].mxu0
  %v330 = vadd.f32 0.0, %v329
  %v331 = vpop.f32.mrb[0].mxu0
  %332 = vdwg.mxu0
  %v333 = vadd.f32 %v102, %v330
  %v334 = vtanh.pop %v333
  %v336 = vsel %vm109, %v334, 0
  %338 = vmatprep.subr.mxu0 0.0
  %339 = vmatpush1.msra.mxu0 %v24
  %340 = vmatprep.subr.mxu0 0.0
  %341 = vmatpush1.msra.mxu0 %v25
  %342 = vmatprep.subr.mxu0 0.0
  %343 = vmatpush1.msra.mxu0 %v26
  %344 = vmatprep.subr.mxu0 0.0
  %345 = vmatpush1.msra.mxu0 %v27
  %346 = vmatprep.subr.mxu0 0.0
  %347 = vmatpush1.msra.mxu0 0.0
  %348 = vmatprep.subr.mxu0 0.0
  %349 = vmatpush1.msra.mxu0 0.0
  %350 = vmatprep.subr.mxu0 0.0
  %351 = vmatpush1.msra.mxu0 0.0
  %352 = vmatprep.subr.mxu0 0.0
  %353 = vmatpush1.msra.mxu0 0.0
  %354 = vmatprep.subr.mxu0 0.0
  %355 = vmatpush1.msra.mxu0 0.0
  %356 = vmatprep.subr.mxu0 0.0
  %357 = vmatpush1.msra.mxu0 0.0
  %358 = vmatprep.subr.mxu0 0.0
  %359 = vmatpush1.msra.mxu0 0.0
  %360 = vmatprep.subr.mxu0 0.0
  %361 = vmatpush1.msra.mxu0 0.0
  %362 = vmatprep.subr.mxu0 0.0
  %363 = vmatpush1.msra.mxu0 0.0
  %364 = vmatprep.subr.mxu0 0.0
  %365 = vmatpush1.msra.mxu0 0.0
  %366 = vmatprep.subr.mxu0 0.0
  %367 = vmatpush1.msra.mxu0 0.0
  %368 = vmatprep.subr.mxu0 0.0
  %369 = vmatpush1.msra.mxu0 0.0
  %370 = vmatprep.subr.mxu0 0.0
  %371 = vmatpush1.msra.mxu0 0.0
  %372 = vmatprep.subr.mxu0 0.0
  %373 = vmatpush1.msra.mxu0 0.0
  %374 = vmatprep.subr.mxu0 0.0
  %375 = vmatpush1.msra.mxu0 0.0
  %376 = vmatprep.subr.mxu0 0.0
  %377 = vmatpush1.msra.mxu0 0.0
  %378 = vmatprep.subr.mxu0 0.0
  %379 = vmatpush1.msra.mxu0 0.0
  %380 = vmatprep.subr.mxu0 0.0
  %381 = vmatpush1.msra.mxu0 0.0
  %382 = vmatprep.subr.mxu0 0.0
  %383 = vmatpush1.msra.mxu0 0.0
  %384 = vmatprep.subr.mxu0 0.0
  %385 = vmatpush1.msra.mxu0 0.0
  %386 = vmatprep.subr.mxu0 0.0
  %387 = vmatpush1.msra.mxu0 0.0
  %388 = vmatprep.subr.mxu0 0.0
  %389 = vmatpush1.msra.mxu0 0.0
  %390 = vmatprep.subr.mxu0 0.0
  %391 = vmatpush1.msra.mxu0 0.0
  %392 = vmatprep.subr.mxu0 0.0
  %393 = vmatpush1.msra.mxu0 0.0
  %394 = vmatprep.subr.mxu0 0.0
  %395 = vmatpush1.msra.mxu0 0.0
  %396 = vmatprep.subr.mxu0 0.0
  %397 = vmatpush1.msra.mxu0 0.0
  %398 = vmatprep.subr.mxu0 0.0
  %399 = vmatpush1.msra.mxu0 0.0
  %400 = vmatprep.subr.mxu0 0.0
  %401 = vmatpush1.msra.mxu0 0.0
  %402 = vmatprep.mubr.f32.mxu0 0.0
  %403 = vmatmul.mubr.f32.gmra.mrb[0].mxu0 %v336
  %v404 = vpop.f32.mrb[0].mxu0
  %v405 = vadd.f32 0.0, %v404
  %v406 = vpop.f32.mrb[0].mxu0
  %407 = vdwg.mxu0
  %v408 = vadd.f32 %v103, %v405
  %v409 = vtanh.pop %v408
  %v411 = vsel %vm109, %v409, 0
  %413 = vmatprep.subr.mxu0 0.0
  %414 = vmatpush1.msra.mxu0 %v24
  %415 = vmatprep.subr.mxu0 0.0
  %416 = vmatpush1.msra.mxu0 %v25
  %417 = vmatprep.subr.mxu0 0.0
  %418 = vmatpush1.msra.mxu0 %v26
  %419 = vmatprep.subr.mxu0 0.0
  %420 = vmatpush1.msra.mxu0 %v27
  %421 = vmatprep.subr.mxu0 0.0
  %422 = vmatpush1.msra.mxu0 0.0
  %423 = vmatprep.subr.mxu0 0.0
  %424 = vmatpush1.msra.mxu0 0.0
  %425 = vmatprep.subr.mxu0 0.0
  %426 = vmatpush1.msra.mxu0 0.0
  %427 = vmatprep.subr.mxu0 0.0
  %428 = vmatpush1.msra.mxu0 0.0
  %429 = vmatprep.subr.mxu0 0.0
  %430 = vmatpush1.msra.mxu0 0.0
  %431 = vmatprep.subr.mxu0 0.0
  %432 = vmatpush1.msra.mxu0 0.0
  %433 = vmatprep.subr.mxu0 0.0
  %434 = vmatpush1.msra.mxu0 0.0
  %435 = vmatprep.subr.mxu0 0.0
  %436 = vmatpush1.msra.mxu0 0.0
  %437 = vmatprep.subr.mxu0 0.0
  %438 = vmatpush1.msra.mxu0 0.0
  %439 = vmatprep.subr.mxu0 0.0
  %440 = vmatpush1.msra.mxu0 0.0
  %441 = vmatprep.subr.mxu0 0.0
  %442 = vmatpush1.msra.mxu0 0.0
  %443 = vmatprep.subr.mxu0 0.0
  %444 = vmatpush1.msra.mxu0 0.0
  %445 = vmatprep.subr.mxu0 0.0
  %446 = vmatpush1.msra.mxu0 0.0
  %447 = vmatprep.subr.mxu0 0.0
  %448 = vmatpush1.msra.mxu0 0.0
  %449 = vmatprep.subr.mxu0 0.0
  %450 = vmatpush1.msra.mxu0 0.0
  %451 = vmatprep.subr.mxu0 0.0
  %452 = vmatpush1.msra.mxu0 0.0
  %453 = vmatprep.subr.mxu0 0.0
  %454 = vmatpush1.msra.mxu0 0.0
  %455 = vmatprep.subr.mxu0 0.0
  %456 = vmatpush1.msra.mxu0 0.0
  %457 = vmatprep.subr.mxu0 0.0
  %458 = vmatpush1.msra.mxu0 0.0
  %459 = vmatprep.subr.mxu0 0.0
  %460 = vmatpush1.msra.mxu0 0.0
  %461 = vmatprep.subr.mxu0 0.0
  %462 = vmatpush1.msra.mxu0 0.0
  %463 = vmatprep.subr.mxu0 0.0
  %464 = vmatpush1.msra.mxu0 0.0
  %465 = vmatprep.subr.mxu0 0.0
  %466 = vmatpush1.msra.mxu0 0.0
  %467 = vmatprep.subr.mxu0 0.0
  %468 = vmatpush1.msra.mxu0 0.0
  %469 = vmatprep.subr.mxu0 0.0
  %470 = vmatpush1.msra.mxu0 0.0
  %471 = vmatprep.subr.mxu0 0.0
  %472 = vmatpush1.msra.mxu0 0.0
  %473 = vmatprep.subr.mxu0 0.0
  %474 = vmatpush1.msra.mxu0 0.0
  %475 = vmatprep.subr.mxu0 0.0
  %476 = vmatpush1.msra.mxu0 0.0
  %477 = vmatprep.mubr.f32.mxu0 0.0
  %478 = vmatmul.mubr.f32.gmra.mrb[0].mxu0 %v411
  %v479 = vpop.f32.mrb[0].mxu0
  %v480 = vadd.f32 0.0, %v479
  %v481 = vpop.f32.mrb[0].mxu0
  %482 = vdwg.mxu0
  %v483 = vadd.f32 %v104, %v480
  %v484 = vtanh.pop %v483
  %v486 = vsel %vm109, %v484, 0
  %488 = vmatprep.subr.mxu0 0.0
  %489 = vmatpush1.msra.mxu0 %v24
  %490 = vmatprep.subr.mxu0 0.0
  %491 = vmatpush1.msra.mxu0 %v25
  %492 = vmatprep.subr.mxu0 0.0
  %493 = vmatpush1.msra.mxu0 %v26
  %494 = vmatprep.subr.mxu0 0.0
  %495 = vmatpush1.msra.mxu0 %v27
  %496 = vmatprep.subr.mxu0 0.0
  %497 = vmatpush1.msra.mxu0 0.0
  %498 = vmatprep.subr.mxu0 0.0
  %499 = vmatpush1.msra.mxu0 0.0
  %500 = vmatprep.subr.mxu0 0.0
  %501 = vmatpush1.msra.mxu0 0.0
  %502 = vmatprep.subr.mxu0 0.0
  %503 = vmatpush1.msra.mxu0 0.0
  %504 = vmatprep.subr.mxu0 0.0
  %505 = vmatpush1.msra.mxu0 0.0
  %506 = vmatprep.subr.mxu0 0.0
  %507 = vmatpush1.msra.mxu0 0.0
  %508 = vmatprep.subr.mxu0 0.0
  %509 = vmatpush1.msra.mxu0 0.0
  %510 = vmatprep.subr.mxu0 0.0
  %511 = vmatpush1.msra.mxu0 0.0
  %512 = vmatprep.subr.mxu0 0.0
  %513 = vmatpush1.msra.mxu0 0.0
  %514 = vmatprep.subr.mxu0 0.0
  %515 = vmatpush1.msra.mxu0 0.0
  %516 = vmatprep.subr.mxu0 0.0
  %517 = vmatpush1.msra.mxu0 0.0
  %518 = vmatprep.subr.mxu0 0.0
  %519 = vmatpush1.msra.mxu0 0.0
  %520 = vmatprep.subr.mxu0 0.0
  %521 = vmatpush1.msra.mxu0 0.0
  %522 = vmatprep.subr.mxu0 0.0
  %523 = vmatpush1.msra.mxu0 0.0
  %524 = vmatprep.subr.mxu0 0.0
  %525 = vmatpush1.msra.mxu0 0.0
  %526 = vmatprep.subr.mxu0 0.0
  %527 = vmatpush1.msra.mxu0 0.0
  %528 = vmatprep.subr.mxu0 0.0
  %529 = vmatpush1.msra.mxu0 0.0
  %530 = vmatprep.subr.mxu0 0.0
  %531 = vmatpush1.msra.mxu0 0.0
  %532 = vmatprep.subr.mxu0 0.0
  %533 = vmatpush1.msra.mxu0 0.0
  %534 = vmatprep.subr.mxu0 0.0
  %535 = vmatpush1.msra.mxu0 0.0
  %536 = vmatprep.subr.mxu0 0.0
  %537 = vmatpush1.msra.mxu0 0.0
  %538 = vmatprep.subr.mxu0 0.0
  %539 = vmatpush1.msra.mxu0 0.0
  %540 = vmatprep.subr.mxu0 0.0
  %541 = vmatpush1.msra.mxu0 0.0
  %542 = vmatprep.subr.mxu0 0.0
  %543 = vmatpush1.msra.mxu0 0.0
  %544 = vmatprep.subr.mxu0 0.0
  %545 = vmatpush1.msra.mxu0 0.0
  %546 = vmatprep.subr.mxu0 0.0
  %547 = vmatpush1.msra.mxu0 0.0
  %548 = vmatprep.subr.mxu0 0.0
  %549 = vmatpush1.msra.mxu0 0.0
  %550 = vmatprep.subr.mxu0 0.0
  %551 = vmatpush1.msra.mxu0 0.0
  %552 = vmatprep.mubr.f32.mxu0 0.0
  %553 = vmatmul.mubr.f32.gmra.mrb[0].mxu0 %v486
  %v554 = vpop.f32.mrb[0].mxu0
  %v555 = vadd.f32 0.0, %v554
  %v556 = vpop.f32.mrb[0].mxu0
  %557 = vdwg.mxu0
  %v558 = vadd.f32 %v105, %v555
  %v559 = vtanh.pop %v558
  %v561 = vsel %vm109, %v559, 0
  %563 = vmatprep.subr.mxu0 0.0
  %564 = vmatpush1.msra.mxu0 %v24
  %565 = vmatprep.subr.mxu0 0.0
  %566 = vmatpush1.msra.mxu0 %v25
  %567 = vmatprep.subr.mxu0 0.0
  %568 = vmatpush1.msra.mxu0 %v26
  %569 = vmatprep.subr.mxu0 0.0
  %570 = vmatpush1.msra.mxu0 %v27
  %571 = vmatprep.subr.mxu0 0.0
  %572 = vmatpush1.msra.mxu0 0.0
  %573 = vmatprep.subr.mxu0 0.0
  %574 = vmatpush1.msra.mxu0 0.0
  %575 = vmatprep.subr.mxu0 0.0
  %576 = vmatpush1.msra.mxu0 0.0
  %577 = vmatprep.subr.mxu0 0.0
  %578 = vmatpush1.msra.mxu0 0.0
  %579 = vmatprep.subr.mxu0 0.0
  %580 = vmatpush1.msra.mxu0 0.0
  %581 = vmatprep.subr.mxu0 0.0
  %582 = vmatpush1.msra.mxu0 0.0
  %583 = vmatprep.subr.mxu0 0.0
  %584 = vmatpush1.msra.mxu0 0.0
  %585 = vmatprep.subr.mxu0 0.0
  %586 = vmatpush1.msra.mxu0 0.0
  %587 = vmatprep.subr.mxu0 0.0
  %588 = vmatpush1.msra.mxu0 0.0
  %589 = vmatprep.subr.mxu0 0.0
  %590 = vmatpush1.msra.mxu0 0.0
  %591 = vmatprep.subr.mxu0 0.0
  %592 = vmatpush1.msra.mxu0 0.0
  %593 = vmatprep.subr.mxu0 0.0
  %594 = vmatpush1.msra.mxu0 0.0
  %595 = vmatprep.subr.mxu0 0.0
  %596 = vmatpush1.msra.mxu0 0.0
  %597 = vmatprep.subr.mxu0 0.0
  %598 = vmatpush1.msra.mxu0 0.0
  %599 = vmatprep.subr.mxu0 0.0
  %600 = vmatpush1.msra.mxu0 0.0
  %601 = vmatprep.subr.mxu0 0.0
  %602 = vmatpush1.msra.mxu0 0.0
  %603 = vmatprep.subr.mxu0 0.0
  %604 = vmatpush1.msra.mxu0 0.0
  %605 = vmatprep.subr.mxu0 0.0
  %606 = vmatpush1.msra.mxu0 0.0
  %607 = vmatprep.subr.mxu0 0.0
  %608 = vmatpush1.msra.mxu0 0.0
  %609 = vmatprep.subr.mxu0 0.0
  %610 = vmatpush1.msra.mxu0 0.0
  %611 = vmatprep.subr.mxu0 0.0
  %612 = vmatpush1.msra.mxu0 0.0
  %613 = vmatprep.subr.mxu0 0.0
  %614 = vmatpush1.msra.mxu0 0.0
  %615 = vmatprep.subr.mxu0 0.0
  %616 = vmatpush1.msra.mxu0 0.0
  %617 = vmatprep.subr.mxu0 0.0
  %618 = vmatpush1.msra.mxu0 0.0
  %619 = vmatprep.subr.mxu0 0.0
  %620 = vmatpush1.msra.mxu0 0.0
  %621 = vmatprep.subr.mxu0 0.0
  %622 = vmatpush1.msra.mxu0 0.0
  %623 = vmatprep.subr.mxu0 0.0
  %624 = vmatpush1.msra.mxu0 0.0
  %625 = vmatprep.subr.mxu0 0.0
  %626 = vmatpush1.msra.mxu0 0.0
  %627 = vmatprep.mubr.f32.mxu0 0.0
  %628 = vmatmul.mubr.f32.gmra.mrb[0].mxu0 %v561
  %v629 = vpop.f32.mrb[0].mxu0
  %v630 = vadd.f32 0.0, %v629
  %v631 = vpop.f32.mrb[0].mxu0
  %632 = vdwg.mxu0
  %v633 = vadd.f32 %v106, %v630
  %v634 = vtanh.pop %v633
  %v636 = vsel %vm109, %v634, 0
  %638 = vmatprep.subr.mxu0 0.0
  %639 = vmatpush1.msra.mxu0 %v24
  %640 = vmatprep.subr.mxu0 0.0
  %641 = vmatpush1.msra.mxu0 %v25
  %642 = vmatprep.subr.mxu0 0.0
  %643 = vmatpush1.msra.mxu0 %v26
  %644 = vmatprep.subr.mxu0 0.0
  %645 = vmatpush1.msra.mxu0 %v27
  %646 = vmatprep.subr.mxu0 0.0
  %647 = vmatpush1.msra.mxu0 0.0
  %648 = vmatprep.subr.mxu0 0.0
  %649 = vmatpush1.msra.mxu0 0.0
  %650 = vmatprep.subr.mxu0 0.0
  %651 = vmatpush1.msra.mxu0 0.0
  %652 = vmatprep.subr.mxu0 0.0
  %653 = vmatpush1.msra.mxu0 0.0
  %654 = vmatprep.subr.mxu0 0.0
  %655 = vmatpush1.msra.mxu0 0.0
  %656 = vmatprep.subr.mxu0 0.0
  %657 = vmatpush1.msra.mxu0 0.0
  %658 = vmatprep.subr.mxu0 0.0
  %659 = vmatpush1.msra.mxu0 0.0
  %660 = vmatprep.subr.mxu0 0.0
  %661 = vmatpush1.msra.mxu0 0.0
  %662 = vmatprep.subr.mxu0 0.0
  %663 = vmatpush1.msra.mxu0 0.0
  %664 = vmatprep.subr.mxu0 0.0
  %665 = vmatpush1.msra.mxu0 0.0
  %666 = vmatprep.subr.mxu0 0.0
  %667 = vmatpush1.msra.mxu0 0.0
  %668 = vmatprep.subr.mxu0 0.0
  %669 = vmatpush1.msra.mxu0 0.0
  %670 = vmatprep.subr.mxu0 0.0
  %671 = vmatpush1.msra.mxu0 0.0
  %672 = vmatprep.subr.mxu0 0.0
  %673 = vmatpush1.msra.mxu0 0.0
  %674 = vmatprep.subr.mxu0 0.0
  %675 = vmatpush1.msra.mxu0 0.0
  %676 = vmatprep.subr.mxu0 0.0
  %677 = vmatpush1.msra.mxu0 0.0
  %678 = vmatprep.subr.mxu0 0.0
  %679 = vmatpush1.msra.mxu0 0.0
  %680 = vmatprep.subr.mxu0 0.0
  %681 = vmatpush1.msra.mxu0 0.0
  %682 = vmatprep.subr.mxu0 0.0
  %683 = vmatpush1.msra.mxu0 0.0
  %684 = vmatprep.subr.mxu0 0.0
  %685 = vmatpush1.msra.mxu0 0.0
  %686 = vmatprep.subr.mxu0 0.0
  %687 = vmatpush1.msra.mxu0 0.0
  %688 = vmatprep.subr.mxu0 0.0
  %689 = vmatpush1.msra.mxu0 0.0
  %690 = vmatprep.subr.mxu0 0.0
  %691 = vmatpush1.msra.mxu0 0.0
  %692 = vmatprep.subr.mxu0 0.0
  %693 = vmatpush1.msra.mxu0 0.0
  %694 = vmatprep.subr.mxu0 0.0
  %695 = vmatpush1.msra.mxu0 0.0
  %696 = vmatprep.subr.mxu0 0.0
  %697 = vmatpush1.msra.mxu0 0.0
  %698 = vmatprep.subr.mxu0 0.0
  %699 = vmatpush1.msra.mxu0 0.0
  %700 = vmatprep.subr.mxu0 0.0
  %701 = vmatpush1.msra.mxu0 0.0
  %702 = vmatprep.mubr.f32.mxu0 0.0
  %703 = vmatmul.mubr.f32.gmra.mrb[0].mxu0 %v636
  %v704 = vpop.f32.mrb[0].mxu0
  %v705 = vadd.f32 0.0, %v704
  %v706 = vpop.f32.mrb[0].mxu0
  %707 = vdwg.mxu0
  %v708 = vadd.f32 %v107, %v705
  %v709 = vtanh.pop %v708
  %v710 = vlaneseq
  %v711 = vshrl.u32 %v710, 7
  %v712 = vsub.s32 0, %v711
  %v713 = vrot.slane %v23, %v712
  %v714 = vmul.f32 %v184, %v713
  %v715 = vmul.f32 %v259, %v713
  %v716 = vmul.f32 %v334, %v713
  %v717 = vmul.f32 %v409, %v713
  %v718 = vmul.f32 %v484, %v713
  %v719 = vmul.f32 %v559, %v713
  %v720 = vmul.f32 %v634, %v713
  %v721 = vmul.f32 %v709, %v713
  %vm722 = vcmask 254976
  %v723 = vsel %vm722, %v714, 0.0
  %724 = vadd.xlane.f32.xlu0 %v723
  %v725 = vpop.xlane.xlu0 %724
  %v726 = vsel %vm722, %v715, 0.0
  %727 = vadd.xlane.f32.xlu0 %v726
  %v728 = vpop.xlane.xlu0 %727
  %v729 = vsel %vm722, %v716, 0.0
  %730 = vadd.xlane.f32.xlu0 %v729
  %v731 = vpop.xlane.xlu0 %730
  %v732 = vsel %vm722, %v717, 0.0
  %733 = vadd.xlane.f32.xlu0 %v732
  %v734 = vpop.xlane.xlu0 %733
  %v735 = vsel %vm722, %v718, 0.0
  %736 = vadd.xlane.f32.xlu0 %v735
  %v737 = vpop.xlane.xlu0 %736
  %v738 = vsel %vm722, %v719, 0.0
  %739 = vadd.xlane.f32.xlu0 %v738
  %v740 = vpop.xlane.xlu0 %739
  %v741 = vsel %vm722, %v720, 0.0
  %742 = vadd.xlane.f32.xlu0 %v741
  %v743 = vpop.xlane.xlu0 %742
  %v744 = vsel %vm722, %v721, 0.0
  %745 = vadd.xlane.f32.xlu0 %v744
  %v746 = vpop.xlane.xlu0 %745
  %s747 = sld [smem:[#allocation2]]
  %v748 = vstv %s747
  %v749 = vadd.f32 %v725, %v748
  %v750 = vadd.f32 %v728, %v748
  %v751 = vadd.f32 %v731, %v748
  %v752 = vadd.f32 %v734, %v748
  %v753 = vadd.f32 %v737, %v748
  %v754 = vadd.f32 %v740, %v748
  %v755 = vadd.f32 %v743, %v748
  %v756 = vadd.f32 %v746, %v748
  %v765 = vlaneseq
  %v766 = vand.u32 %v765, 127
  %v767 = vlaneseq
  %v768 = vshrl.u32 %v767, 7
  %v769 = vsub.s32 %v766, %v768
  %v770 = vrot.slane %v749, %v769
  %v771 = vlaneseq
  %v772 = vshrl.u32 %v771, 7
  %v773 = vsub.s32 %v766, %v772
  %v774 = vrot.slane %v750, %v773
  %v775 = vlaneseq
  %v776 = vshrl.u32 %v775, 7
  %v777 = vsub.s32 %v766, %v776
  %v778 = vrot.slane %v751, %v777
  %v779 = vlaneseq
  %v780 = vshrl.u32 %v779, 7
  %v781 = vsub.s32 %v766, %v780
  %v782 = vrot.slane %v752, %v781
  %v783 = vlaneseq
  %v784 = vshrl.u32 %v783, 7
  %v785 = vsub.s32 %v766, %v784
  %v786 = vrot.slane %v753, %v785
  %v787 = vlaneseq
  %v788 = vshrl.u32 %v787, 7
  %v789 = vsub.s32 %v766, %v788
  %v790 = vrot.slane %v754, %v789
  %v791 = vlaneseq
  %v792 = vshrl.u32 %v791, 7
  %v793 = vsub.s32 %v766, %v792
  %v794 = vrot.slane %v755, %v793
  %v795 = vlaneseq
  %v796 = vshrl.u32 %v795, 7
  %v797 = vsub.s32 %v766, %v796
  %v798 = vrot.slane %v756, %v797
  %vm799 = vcmask 1041409
  %v800 = vsel %vm799, %v774, %v770
  %vm801 = vcmask 1042434
  %v802 = vsel %vm801, %v778, %v800
  %vm803 = vcmask 1043459
  %v804 = vsel %vm803, %v782, %v802
  %vm805 = vcmask 1044484
  %v806 = vsel %vm805, %v786, %v804
  %vm807 = vcmask 1045509
  %v808 = vsel %vm807, %v790, %v806
  %vm809 = vcmask 1046534
  %v810 = vsel %vm809, %v794, %v808
  %vm811 = vcmask 1047559
  %v812 = vsel %vm811, %v798, %v810
  %vm814 = vcmask 15360
  %815 = vst.msk [vmem:[%s4] sm:$0xff] %vm814, %v812
  %816 = vst.msk [vmem:[%s5] sm:$0x3] %vm722, %v709
  // Predicated region
  $region18: #{rnn_forward.1} parent=0 // pred_check
    _
  $region19: #{rnn_forward.1} parent=0 // pred_check_branch
    %818 = sbr.rel (0) target = $region21
  $region20: #{rnn_forward.1} parent=0 // pred_region
    _
  $region21: #{rnn_forward.1} parent=0 // pred_fallthru
    _
  // Predicated region
  $region22: #{rnn_forward.1} parent=0 // pred_check
    _
  $region23: #{rnn_forward.1} parent=0 // pred_check_branch
    %820 = sbr.rel (0) target = $region25
  $region24: #{rnn_forward.1} parent=0 // pred_region
    _
  $region25: #{rnn_forward.1} parent=0 // pred_fallthru
    _
  // Predicated region
  $region26: #{rnn_forward.1} parent=0 // pred_check
    _
  $region27: #{rnn_forward.1} parent=0 // pred_check_branch
    %822 = sbr.rel (0) target = $region29
  $region28: #{rnn_forward.1} parent=0 // pred_region
    _
  $region29: #{rnn_forward.1} parent=0 // pred_fallthru
    _
  // Predicated region
  $region30: #{rnn_forward.1} parent=0 // pred_check
    _
  $region31: #{rnn_forward.1} parent=0 // pred_check_branch
    %824 = sbr.rel (0) target = $region33
  $region32: #{rnn_forward.1} parent=0 // pred_region
    _
  $region33: #{rnn_forward.1} parent=0 // pred_fallthru
    _

</llo_original>
